<compile_context>
chip_gen: v7x
topology: tpu7x:2x2x1
jax: 0.10.0
libtpu: 0.0.40
codegen_flags: <defaults>
</compile_context>

<pallas_src>
import functools

import numpy as np
import jax
import jax.numpy as jnp
from jax import lax
from jax.experimental import pallas as pl
from jax.experimental.pallas import tpu as pltpu


def _round_up(a, b):
    return -(-a // b) * b


def make_kernel(k):
    """JAX port of the PyTorch make_kernel (deterministic buffer init)."""
    k = jnp.asarray(k, dtype=jnp.float32)
    if k.ndim == 1:
        k = k[None, :] * k[:, None]
    k = k / jnp.sum(k)
    return k


def _fir_down_kernel(ph_ref, o_ref, *, taps, down, TOH, OW):
    """One (channel-block, OH-tile) output block of the strided FIR.

    ph_ref : (1, down*down, TOH+DY, Wx, tc)  phase-decomposed, channels-last,
             halo'd row tile.  Phase p = px*down + py, so all py for a fixed px
             are contiguous (lets us hoist the sublane (dx) shift per kx).
    o_ref  : (TOH, OW, tc)
    taps   : tuple-of-tuples of Python floats (flipped FIR kernel), compile-time.
    """
    KH, KW = len(taps), len(taps[0])
    gsum = {}                                # distinct weight -> sum of its taps
    for kx in range(KW):                     # outer kx: ONE sublane-shifted load
        px, dx = kx % down, kx // down       # per kx (hoisted dx offset)
        wslab = ph_ref[0, px * down:(px + 1) * down, :, dx:dx + OW, :]
        wslab = wslab.astype(jnp.float32)    # (down, TOH+DY, OW, tc)
        for ky in range(KH):
            w = taps[ky][kx]
            if w == 0.0:
                continue
            py, dy = ky % down, ky // down
            tap = wslab[py, dy:dy + TOH, :, :]   # value slicing only (no load)
            gsum[w] = tap if w not in gsum else gsum[w] + tap
    # symmetric FIR: few distinct weights -> sum slabs first, multiply once
    acc = None
    for w, s in gsum.items():
        term = w * s
        acc = term if acc is None else acc + term
    if acc is None:
        acc = jnp.zeros(o_ref.shape, jnp.float32)
    o_ref[...] = acc.astype(o_ref.dtype)


def upfirdn2d_downsample(x, kernel2d, factor, pad, *, block_bytes_budget=None):
    """upfirdn2d(x, kernel2d, up=1, down=factor, pad=pad) for NCHW input."""
    N, C, H, W = x.shape
    k_np = np.asarray(kernel2d, dtype=np.float32)   # concrete module buffer
    KH, KW = k_np.shape
    pad0, pad1 = pad
    down = factor

    # positive padding then (possible) cropping — matches upfirdn2d_native
    xp = jnp.pad(x, ((0, 0), (0, 0),
                     (max(pad0, 0), max(pad1, 0)),
                     (max(pad0, 0), max(pad1, 0))))
    xp = xp[:, :,
            max(-pad0, 0): xp.shape[2] - max(-pad1, 0),
            max(-pad0, 0): xp.shape[3] - max(-pad1, 0)]
    Hp, Wp = xp.shape[2], xp.shape[3]
    OH = (Hp - KH) // down + 1
    OW = (Wp - KW) // down + 1
    NC = N * C
    DY = (KH - 1) // down            # halo rows along the Hy phase axis
    Hy = -(-Hp // down)
    Wx = -(-Wp // down)
    isz = jnp.dtype(x.dtype).itemsize

    # upfirdn2d flips the kernel before the conv -> bake flipped taps as constants
    kflip = np.flip(k_np, (0, 1))
    taps = tuple(tuple(float(v) for v in row) for row in kflip)
    nz = [v for row in taps for v in row if v != 0.0]
    nnz = max(1, len(nz))
    n_groups = max(1, len(set(nz)))

    # ---- lane (channel) padding --------------------------------------------
    if NC >= 128:
        ncp0 = _round_up(NC, 128)    # lane-dense stores
    else:
        # full 128-lane padding would multiply HBM traffic on this mem-bound
        # op; accept masked lane stores for small NC.
        # TODO(synk): for tiny-NC / huge-spatial maps fold OW into the lane dim.
        ncp0 = _round_up(NC, 8)

    # ---- generation-aware VMEM limit & per-step block budget ----------------
    phys_vmem = 64 * 1024 * 1024                     # conservative default (v7x)
    try:
        phys_vmem = int(getattr(pltpu.get_tpu_info(), "vmem_capacity_bytes",
                                phys_vmem))
    except Exception:
        pass
    # ~64 MiB on v5e/v6e (128 MiB physical), ~48 MiB on v7x (64 MiB physical)
    vmem_limit = int(min(64 * 1024 * 1024, phys_vmem * 3 // 4))
    budget = (int(vmem_limit * 0.7) if block_bytes_budget is None
              else int(block_bytes_budget))

    def blk_bytes(tc, toh):
        # double-buffered in/out blocks + f32 accum / group-sum / hoisted-slab temps
        tohd = toh + DY
        in_b = down * down * tohd * Wx * tc * isz
        out_b = toh * OW * tc * isz
        tmp = down * tohd * OW * tc * 4 + (n_groups + 2) * toh * OW * tc * 4
        return 2 * (in_b + out_b) + tmp

    # ---- choose channel block (tc) and OH row tile (TOH) under the budget ----
    tc = min(ncp0, 128)
    if blk_bytes(tc, 1) > budget:
        # extreme spatial size with few channels: narrow the lane block
        while tc > 8 and blk_bytes(tc, 1) > budget:
            tc //= 2
        TOH = 1
    else:
        if ncp0 > 128:
            while tc + 128 <= ncp0 and blk_bytes(tc + 128, OH) <= budget:
                tc += 128
        TOH = OH
        while blk_bytes(tc, TOH) > budget:
            TOH = (TOH + 1) // 2

    nblk_c = -(-ncp0 // tc)
    if tc % 128 == 0 and ncp0 % 128 == 0:
        # balance channel blocks so the zero-padded tail stays small
        tc = 128 * (-(-(ncp0 // 128) // nblk_c))
        nblk_c = -(-ncp0 // tc)
    ncp = nblk_c * tc

    n_t = -(-OH // TOH)
    # v7x megacore + DMA/compute pipelining: aim for >= 4 grid steps
    if nblk_c * n_t < 4:
        n_t = min(OH, -(-4 // nblk_c))
    TOH = -(-OH // n_t)
    n_t = -(-OH // TOH)
    OHpad = n_t * TOH
    TOHD = TOH + DY

    # ---- single layout pass (pure glue): NCHW -> channels-last with the H/W
    # phase split and the halo'd OH-row tiling riding on the same copy.
    x2 = xp.reshape(NC, Hp, Wp)
    x2 = jnp.pad(x2, ((0, ncp - NC),
                      (0, Hy * down - Hp),
                      (0, Wx * down - Wp)))
    x5 = x2.reshape(ncp, Hy, down, Wx, down)            # [c, y, py, x, px]
    HY_need = OHpad + DY
    if HY_need > Hy:
        x5 = jnp.pad(x5, ((0, 0), (0, HY_need - Hy), (0, 0), (0, 0), (0, 0)))
    else:
        x5 = x5[:, :HY_need]
    main = x5[:, :OHpad].reshape(ncp, n_t, TOH, down, Wx, down)
    if DY > 0:
        halo_last = x5[:, OHpad:OHpad + DY].reshape(ncp, 1, DY, down, Wx, down)
        if n_t > 1:
            halo = jnp.concatenate([main[:, 1:, :DY], halo_last], axis=1)
        else:
            halo = halo_last
        tiled = jnp.concatenate([main, halo], axis=2)   # [c, t, y(+halo), py, x, px]
    else:
        tiled = main
    # -> [t, px, py, y, x, c]; phases merged px-major so a fixed px is contiguous
    ph_t = tiled.transpose(1, 5, 3, 2, 4, 0).reshape(
        n_t, down * down, TOHD, Wx, ncp)

    kern_fn = functools.partial(_fir_down_kernel, taps=taps, down=down,
                                TOH=TOH, OW=OW)

    cost = pl.CostEstimate(
        flops=int(2 * OHpad * OW * ncp * nnz),
        transcendentals=0,
        bytes_accessed=int(ph_t.size * isz + OHpad * OW * ncp * isz),
    )
    cparams = pltpu.CompilerParams(
        dimension_semantics=("parallel", "parallel"),
        vmem_limit_bytes=vmem_limit,
    )

    out_cl = pl.pallas_call(
        kern_fn,
        out_shape=jax.ShapeDtypeStruct((OHpad, OW, ncp), x.dtype),
        grid=(nblk_c, n_t),
        in_specs=[pl.BlockSpec((1, down * down, TOHD, Wx, tc),
                               lambda c, t: (t, 0, 0, 0, c))],
        out_specs=pl.BlockSpec((TOH, OW, tc), lambda c, t: (t, 0, c)),
        compiler_params=cparams,
        cost_estimate=cost,
    )(ph_t)

    # back to NCHW (small, decimated output)
    out = out_cl[:OH, :, :NC].transpose(2, 0, 1).reshape(N, C, OH, OW)
    return out


class Downsample:
    """JAX/Pallas port of the StyleGAN2 Downsample (upfirdn2d, up=1, down=factor)."""

    def __init__(self, kernel, factor=2):
        self.factor = factor
        self.kernel = make_kernel(kernel)          # registered-buffer equivalent
        p = self.kernel.shape[0] - factor
        self.pad = ((p + 1) // 2, p // 2)

    def __call__(self, x, **kw):
        return upfirdn2d_downsample(x, self.kernel, self.factor, self.pad, **kw)


def _ref_downsample(x, ds):
    """Pure-JAX reference: pad -> conv(flipped kernel) -> stride-`factor`."""
    pad0, pad1 = ds.pad
    KH, KW = ds.kernel.shape
    xp = jnp.pad(x, ((0, 0), (0, 0), (pad0, pad1), (pad0, pad1)))
    N, C, Hp, Wp = xp.shape
    w = jnp.flip(ds.kernel, (0, 1)).reshape(1, 1, KH, KW)
    OH = (Hp - KH) // ds.factor + 1
    OW = (Wp - KW) // ds.factor + 1
    return lax.conv_general_dilated(
        xp.reshape(N * C, 1, Hp, Wp), w,
        window_strides=(ds.factor, ds.factor), padding="VALID",
        dimension_numbers=("NCHW", "OIHW", "NCHW"),
    ).reshape(N, C, OH, OW)


if __name__ == "__main__":
    k0, k1 = jax.random.split(jax.random.PRNGKey(0))
    ds = Downsample(kernel=[1, 3, 3, 1], factor=2)

    # --- small default-path check (NC < 128; auto-split into 4 halo'd OH tiles)
    x = jax.random.normal(k0, (2, 4, 16, 16), dtype=jnp.float32)
    out = jax.block_until_ready(ds(x))
    assert out.shape == (2, 4, 8, 8), out.shape
    ref = _ref_downsample(x, ds)
    np.testing.assert_allclose(np.asarray(out), np.asarray(ref),
                               rtol=1e-5, atol=1e-5)

    # --- forced-tiling check: NC > 128 (two 128-channel lane-dense blocks with a
    # zero-padded tail) plus a tiny per-step budget forcing halo'd OH row tiles.
    x2 = jax.random.normal(k1, (1, 192, 24, 40), dtype=jnp.float32)
    out2 = jax.block_until_ready(ds(x2, block_bytes_budget=512 * 1024))
    assert out2.shape == (1, 192, 12, 20), out2.shape
    ref2 = _ref_downsample(x2, ds)
    np.testing.assert_allclose(np.asarray(out2), np.asarray(ref2),
                               rtol=1e-5, atol=1e-5)

    print("KERNEL_OK")
</pallas_src>

<mosaic_0001>
module attributes {stable_mosaic.version = 11 : i64} {
  func.func @_fir_down_kernel(%arg0: i32, %arg1: i32, %arg2: memref<1x4x3x9x8xf32, #tpu.memory_space<vmem>>, %arg3: memref<2x8x8xf32, #tpu.memory_space<vmem>>) attributes {dimension_semantics = [#tpu.dimension_semantics<parallel>, #tpu.dimension_semantics<parallel>], iteration_bounds = array<i64: 1, 4>, scalar_prefetch = 0 : i64, scratch_operands = 0 : i64, tpu.core_type = #tpu.core_type<tc>, window_params = [{transform_indices = @transform_0, window_bounds = array<i64: 1, 4, 3, 9, 8>}, {transform_indices = @transform_1, window_bounds = array<i64: 2, 8, 8>}]} {
    %c0 = arith.constant 0 : index
    %c0_0 = arith.constant 0 : index
    %c0_1 = arith.constant 0 : index
    %c0_2 = arith.constant 0 : index
    %c0_3 = arith.constant 0 : index
    %0 = vector.load %arg2[%c0, %c0_0, %c0_1, %c0_2, %c0_3] : memref<1x4x3x9x8xf32, #tpu.memory_space<vmem>>, vector<1x2x3x8x8xf32>
    %1 = vector.shape_cast %0 : vector<1x2x3x8x8xf32> to vector<2x3x8x8xf32>
    %2 = vector.extract_strided_slice %1 {offsets = [0, 0, 0, 0], sizes = [1, 2, 8, 8], strides = [1, 1, 1, 1]} : vector<2x3x8x8xf32> to vector<1x2x8x8xf32>
    %3 = vector.shape_cast %2 : vector<1x2x8x8xf32> to vector<2x8x8xf32>
    %4 = vector.extract_strided_slice %1 {offsets = [1, 0, 0, 0], sizes = [1, 2, 8, 8], strides = [1, 1, 1, 1]} : vector<2x3x8x8xf32> to vector<1x2x8x8xf32>
    %5 = vector.shape_cast %4 : vector<1x2x8x8xf32> to vector<2x8x8xf32>
    %6 = vector.extract_strided_slice %1 {offsets = [0, 1, 0, 0], sizes = [1, 2, 8, 8], strides = [1, 1, 1, 1]} : vector<2x3x8x8xf32> to vector<1x2x8x8xf32>
    %7 = vector.shape_cast %6 : vector<1x2x8x8xf32> to vector<2x8x8xf32>
    %8 = arith.addf %5, %7 : vector<2x8x8xf32>
    %9 = vector.extract_strided_slice %1 {offsets = [1, 1, 0, 0], sizes = [1, 2, 8, 8], strides = [1, 1, 1, 1]} : vector<2x3x8x8xf32> to vector<1x2x8x8xf32>
    %10 = vector.shape_cast %9 : vector<1x2x8x8xf32> to vector<2x8x8xf32>
    %11 = arith.addf %3, %10 : vector<2x8x8xf32>
    %c0_4 = arith.constant 0 : index
    %c2 = arith.constant 2 : index
    %c0_5 = arith.constant 0 : index
    %c0_6 = arith.constant 0 : index
    %c0_7 = arith.constant 0 : index
    %12 = vector.load %arg2[%c0_4, %c2, %c0_5, %c0_6, %c0_7] : memref<1x4x3x9x8xf32, #tpu.memory_space<vmem>>, vector<1x2x3x8x8xf32>
    %13 = vector.shape_cast %12 : vector<1x2x3x8x8xf32> to vector<2x3x8x8xf32>
    %14 = vector.extract_strided_slice %13 {offsets = [0, 0, 0, 0], sizes = [1, 2, 8, 8], strides = [1, 1, 1, 1]} : vector<2x3x8x8xf32> to vector<1x2x8x8xf32>
    %15 = vector.shape_cast %14 : vector<1x2x8x8xf32> to vector<2x8x8xf32>
    %16 = arith.addf %8, %15 : vector<2x8x8xf32>
    %17 = vector.extract_strided_slice %13 {offsets = [1, 0, 0, 0], sizes = [1, 2, 8, 8], strides = [1, 1, 1, 1]} : vector<2x3x8x8xf32> to vector<1x2x8x8xf32>
    %18 = vector.shape_cast %17 : vector<1x2x8x8xf32> to vector<2x8x8xf32>
    %19 = vector.extract_strided_slice %13 {offsets = [0, 1, 0, 0], sizes = [1, 2, 8, 8], strides = [1, 1, 1, 1]} : vector<2x3x8x8xf32> to vector<1x2x8x8xf32>
    %20 = vector.shape_cast %19 : vector<1x2x8x8xf32> to vector<2x8x8xf32>
    %21 = arith.addf %18, %20 : vector<2x8x8xf32>
    %22 = vector.extract_strided_slice %13 {offsets = [1, 1, 0, 0], sizes = [1, 2, 8, 8], strides = [1, 1, 1, 1]} : vector<2x3x8x8xf32> to vector<1x2x8x8xf32>
    %23 = vector.shape_cast %22 : vector<1x2x8x8xf32> to vector<2x8x8xf32>
    %24 = arith.addf %16, %23 : vector<2x8x8xf32>
    %c0_8 = arith.constant 0 : index
    %c0_9 = arith.constant 0 : index
    %c0_10 = arith.constant 0 : index
    %c1 = arith.constant 1 : index
    %c0_11 = arith.constant 0 : index
    %25 = vector.load %arg2[%c0_8, %c0_9, %c0_10, %c1, %c0_11] : memref<1x4x3x9x8xf32, #tpu.memory_space<vmem>>, vector<1x2x3x8x8xf32>
    %26 = vector.shape_cast %25 : vector<1x2x3x8x8xf32> to vector<2x3x8x8xf32>
    %27 = vector.extract_strided_slice %26 {offsets = [0, 0, 0, 0], sizes = [1, 2, 8, 8], strides = [1, 1, 1, 1]} : vector<2x3x8x8xf32> to vector<1x2x8x8xf32>
    %28 = vector.shape_cast %27 : vector<1x2x8x8xf32> to vector<2x8x8xf32>
    %29 = arith.addf %24, %28 : vector<2x8x8xf32>
    %30 = vector.extract_strided_slice %26 {offsets = [1, 0, 0, 0], sizes = [1, 2, 8, 8], strides = [1, 1, 1, 1]} : vector<2x3x8x8xf32> to vector<1x2x8x8xf32>
    %31 = vector.shape_cast %30 : vector<1x2x8x8xf32> to vector<2x8x8xf32>
    %32 = arith.addf %21, %31 : vector<2x8x8xf32>
    %33 = vector.extract_strided_slice %26 {offsets = [0, 1, 0, 0], sizes = [1, 2, 8, 8], strides = [1, 1, 1, 1]} : vector<2x3x8x8xf32> to vector<1x2x8x8xf32>
    %34 = vector.shape_cast %33 : vector<1x2x8x8xf32> to vector<2x8x8xf32>
    %35 = arith.addf %32, %34 : vector<2x8x8xf32>
    %36 = vector.extract_strided_slice %26 {offsets = [1, 1, 0, 0], sizes = [1, 2, 8, 8], strides = [1, 1, 1, 1]} : vector<2x3x8x8xf32> to vector<1x2x8x8xf32>
    %37 = vector.shape_cast %36 : vector<1x2x8x8xf32> to vector<2x8x8xf32>
    %38 = arith.addf %29, %37 : vector<2x8x8xf32>
    %c0_12 = arith.constant 0 : index
    %c2_13 = arith.constant 2 : index
    %c0_14 = arith.constant 0 : index
    %c1_15 = arith.constant 1 : index
    %c0_16 = arith.constant 0 : index
    %39 = vector.load %arg2[%c0_12, %c2_13, %c0_14, %c1_15, %c0_16] : memref<1x4x3x9x8xf32, #tpu.memory_space<vmem>>, vector<1x2x3x8x8xf32>
    %40 = vector.shape_cast %39 : vector<1x2x3x8x8xf32> to vector<2x3x8x8xf32>
    %41 = vector.extract_strided_slice %40 {offsets = [0, 0, 0, 0], sizes = [1, 2, 8, 8], strides = [1, 1, 1, 1]} : vector<2x3x8x8xf32> to vector<1x2x8x8xf32>
    %42 = vector.shape_cast %41 : vector<1x2x8x8xf32> to vector<2x8x8xf32>
    %43 = arith.addf %11, %42 : vector<2x8x8xf32>
    %44 = vector.extract_strided_slice %40 {offsets = [1, 0, 0, 0], sizes = [1, 2, 8, 8], strides = [1, 1, 1, 1]} : vector<2x3x8x8xf32> to vector<1x2x8x8xf32>
    %45 = vector.shape_cast %44 : vector<1x2x8x8xf32> to vector<2x8x8xf32>
    %46 = arith.addf %38, %45 : vector<2x8x8xf32>
    %47 = vector.extract_strided_slice %40 {offsets = [0, 1, 0, 0], sizes = [1, 2, 8, 8], strides = [1, 1, 1, 1]} : vector<2x3x8x8xf32> to vector<1x2x8x8xf32>
    %48 = vector.shape_cast %47 : vector<1x2x8x8xf32> to vector<2x8x8xf32>
    %49 = arith.addf %46, %48 : vector<2x8x8xf32>
    %50 = vector.extract_strided_slice %40 {offsets = [1, 1, 0, 0], sizes = [1, 2, 8, 8], strides = [1, 1, 1, 1]} : vector<2x3x8x8xf32> to vector<1x2x8x8xf32>
    %51 = vector.shape_cast %50 : vector<1x2x8x8xf32> to vector<2x8x8xf32>
    %52 = arith.addf %43, %51 : vector<2x8x8xf32>
    %cst = arith.constant 1.562500e-02 : f32
    %53 = vector.broadcast %cst : f32 to vector<2x8x8xf32>
    %54 = arith.mulf %53, %52 : vector<2x8x8xf32>
    %cst_17 = arith.constant 4.687500e-02 : f32
    %55 = vector.broadcast %cst_17 : f32 to vector<2x8x8xf32>
    %56 = arith.mulf %55, %49 : vector<2x8x8xf32>
    %57 = arith.addf %54, %56 : vector<2x8x8xf32>
    %cst_18 = arith.constant 1.406250e-01 : f32
    %58 = vector.broadcast %cst_18 : f32 to vector<2x8x8xf32>
    %59 = arith.mulf %58, %35 : vector<2x8x8xf32>
    %60 = arith.addf %57, %59 : vector<2x8x8xf32>
    %c0_19 = arith.constant 0 : index
    %c0_20 = arith.constant 0 : index
    %c0_21 = arith.constant 0 : index
    %61 = vector.load %arg3[%c0_19, %c0_20, %c0_21] : memref<2x8x8xf32, #tpu.memory_space<vmem>>, vector<2x8x8xf32>
    tpu.vector_store %arg3[%c0_19, %c0_20, %c0_21], %60 {strides = array<i32>} : memref<2x8x8xf32, #tpu.memory_space<vmem>>, vector<2x8x8xf32>,
    return
  }
  func.func @transform_0(%arg0: i32, %arg1: i32) -> (i32, i32, i32, i32, i32) {
    %c0_i32 = arith.constant 0 : i32
    %c0_i32_0 = arith.constant 0 : i32
    %c0_i32_1 = arith.constant 0 : i32
    %c0_i32_2 = arith.constant 0 : i32
    return %arg1, %c0_i32, %c0_i32_0, %c0_i32_1, %arg0 : i32, i32, i32, i32, i32
  }
  func.func @transform_1(%arg0: i32, %arg1: i32) -> (i32, i32, i32) {
    %c0_i32 = arith.constant 0 : i32
    %c0_i32_0 = arith.constant 0 : i32
    return %arg1, %c0_i32, %arg0 : i32, i32, i32
  }
}

</mosaic_0001>

<llo_original>
// kernel: tpu_custom_call.1
$region0: #{tpu_custom_call.1}
  #allocation0 [shape = 'u32[]', space=smem, size = 0x4, offset = 0x4, fixed_abs, tag = 'smem constant byte address 0x4 - core index']
  #allocation1 [shape = 'u32[144,128]{1,0:T(1,128)}', space=vmem, size = 0x12000, scoped, tag = 'internal scratch']
  %s0 = inlined_call_operand.vmem [shape: f32[4,4,3,9,8], index: 0, kind: input, shape index: {}]
  %s1 = inlined_call_operand.hbm [shape: f32[8,8,8], index: 1, kind: output, shape index: {}]
  %s2 = sld [smem:[#allocation0]]
  $region37: #{tpu_custom_call.1} parent=0
    _
  %s4 = ssub.s32 1, %s2
  %s5 = scalar_select 0, %s4, %s2
  $region1: #{tpu_custom_call.1} parent=0
    #allocation2 [shape = 'u8[16384]{0}', space=vmem, size = 0x4000, scoped, tag = 'output window, operand 0']
    #allocation3 [shape = 's32[2]{0}', space=sflag, size = 0x8, scoped, tag = 'scoped memory for tpu_custom_call.1']
    %6 = vsyncpa [#allocation3], 0
    %s7 = scalar_lea.sflag [#allocation3], 1
    %8 = vsyncpa %s7, 0
    loop: start=0, step=1, limit=6
    $region2: #{tpu_custom_call.1} parent=1 // loop_pre_header
      _
    $region3: #{tpu_custom_call.1} parent=1 // loop_header
      %s10 = sphi 0, %s14
      %p11 = scmp.ge.s32.totalorder %s10, 6
      %s17 = sphi 0, %s29
      %s18 = sphi 0, %s25
      %s19 = sphi 0, %s17
      %s20 = sphi 0, %s18
      %s21 = sphi 0, %s19
      %s22 = sphi 0, %s20
      %s34 = sphi 0, %s36
      %s37 = sphi 0, %s34
      %s38 = sphi 0, %s37
      %s54 = sphi 0, %s38
      %s62 = sphi 0, %s64
      %s65 = sphi 0, %s62
      %s66 = sphi 0, %s65
      %s82 = sphi 0, %s66
    $region4: #{tpu_custom_call.1} parent=1 // loop_header_branch
      %13 = sbr.rel (%p11) target = $region8
    $region5: #{tpu_custom_call.1} parent=1 // loop_body
      %s15 = ssub.s32 %s10, 1
      %s16 = ssub.s32 %s10, 2
      %s23 = sadd.s32 1, %s18
      %p24 = scmp.ge.s32.totalorder %s23, 4
      %s25 = scalar_select %p24, 0, %s23
      %s26 = sadd.s32 1, %s17
      %s27 = scalar_select %p24, %s26, %s17
      %p28 = scmp.ge.s32.totalorder %s27, 1
      %s29 = scalar_select %p28, 0, %s27
      %s30 = ssub.s32 %s18, %s25
      %s31 = ssub.s32 %s17, %s29
      %s32 = sor.u32 %s30, %s31
      %p33 = scmp.eq.s32.totalorder %s32, 0
      %s35 = sadd.s32 %s34, 1
      %s36 = scalar_select %p33, %s34, %s35
      %p39 = pneg %p33
      %p40 = scmp.eq.s32.totalorder %s10, 3
      %p41 = por %p39, %p40
      %p42 = scmp.ne.s32.totalorder %s34, %s37
      %p43 = scmp.eq.s32.totalorder %s10, 0
      %p44 = por %p42, %p43
      %p45 = scmp.ne.s32.totalorder %s34, %s37
      %p46 = scmp.eq.s32.totalorder %s15, 3
      %p47 = por %p45, %p46
      %p48 = scmp.ne.s32.totalorder %s37, %s38
      %p49 = scmp.eq.s32.totalorder %s15, 0
      %p50 = por %p48, %p49
      %p51 = scmp.ne.s32.totalorder %s37, %s38
      %p52 = scmp.eq.s32.totalorder %s16, 3
      %p53 = por %p51, %p52
      %p55 = scmp.ne.s32.totalorder %s38, %s54
      %p56 = scmp.eq.s32.totalorder %s16, 0
      %p57 = por %p55, %p56
      %s58 = ssub.s32 %s18, %s25
      %s59 = ssub.s32 %s17, %s29
      %s60 = sor.u32 %s58, %s59
      %p61 = scmp.eq.s32.totalorder %s60, 0
      %s63 = sadd.s32 %s62, 1
      %s64 = scalar_select %p61, %s62, %s63
      %p67 = pneg %p61
      %p68 = scmp.eq.s32.totalorder %s10, 3
      %p69 = por %p67, %p68
      %p70 = scmp.ne.s32.totalorder %s62, %s65
      %p71 = scmp.eq.s32.totalorder %s10, 0
      %p72 = por %p70, %p71
      %p73 = scmp.ne.s32.totalorder %s62, %s65
      %p74 = scmp.eq.s32.totalorder %s15, 3
      %p75 = por %p73, %p74
      %p76 = scmp.ne.s32.totalorder %s65, %s66
      %p77 = scmp.eq.s32.totalorder %s15, 0
      %p78 = por %p76, %p77
      %p79 = scmp.ne.s32.totalorder %s65, %s66
      %p80 = scmp.eq.s32.totalorder %s16, 3
      %p81 = por %p79, %p80
      %p83 = scmp.ne.s32.totalorder %s66, %s82
      %p84 = scmp.eq.s32.totalorder %s16, 0
      %p85 = por %p83, %p84
      %p86 = scmp.le.s32.totalorder 1, %s10
      %p87 = scmp.lt.s32.totalorder %s10, 5
      %p88 = pnand %p86, %p87
      %p89 = pneg %p88
      // Predicated region
      $region9: #{tpu_custom_call.1} parent=5 // pred_check
        _
      $region10: #{tpu_custom_call.1} parent=5 // pred_check_branch
        %91 = sbr.rel (%p88) target = $region12
      $region11: #{tpu_custom_call.1} parent=5 // pred_region
        %s92 = ssub.s32 %s10, 1
      $region12: #{tpu_custom_call.1} parent=5 // pred_fallthru
        _
      %p93 = scmp.lt.s32.totalorder %s10, 4
      // Predicated region
      $region13: #{tpu_custom_call.1} parent=5 // pred_check
        %p94 = pneg %p93
      $region14: #{tpu_custom_call.1} parent=5 // pred_check_branch
        %96 = sbr.rel (%p94) target = $region16
      $region15: #{tpu_custom_call.1} parent=5 // pred_region
        // Predicated region
        $region17: #{tpu_custom_call.1} parent=15 // pred_check
          %p97 = pneg %p44
        $region18: #{tpu_custom_call.1} parent=15 // pred_check_branch
          %99 = sbr.rel (%p97) target = $region20
        $region19: #{tpu_custom_call.1} parent=15 // pred_region
          %p100 = scmp.lt.s32.totalorder %s18, 3
          %s101 = scalar_select %p100, %s18, 3
          %p102 = scmp.lt.s32.totalorder %s17, 0
          %s103 = scalar_select %p102, %s17, 0
          %s104 = smul.addr %s101, 24
          %s105 = sadd.s32 %s103, %s104
          %s106 = smul.addr %s105, 8
          %s107 = scalar_lea.vmem %s0, %s106
        $region20: #{tpu_custom_call.1} parent=15 // pred_fallthru
          _
      $region16: #{tpu_custom_call.1} parent=5 // pred_fallthru
        _
      %p108 = scmp.le.s32.totalorder 1, %s10
      %p109 = scmp.lt.s32.totalorder %s10, 5
      %p110 = pnand %p108, %p109
      %p111 = pneg %p110
      // Predicated region
      $region21: #{tpu_custom_call.1} parent=5 // pred_check
        _
      $region22: #{tpu_custom_call.1} parent=5 // pred_check_branch
        %113 = sbr.rel (%p110) target = $region24
      $region23: #{tpu_custom_call.1} parent=5 // pred_region
        %s114 = ssub.s32 %s10, 1
        %p115 = scmp.lt.s32.totalorder %s20, 3
        %s116 = scalar_select %p115, %s20, 3
        %p117 = scmp.lt.s32.totalorder %s19, 0
        %s118 = scalar_select %p117, %s19, 0
        %s119 = smul.addr %s116, 24
        %s120 = sadd.s32 %s118, %s119
        %s121 = smul.addr %s120, 8
        %s122 = scalar_lea.vmem %s0, %s121
        %p123 = pneg %p50
        %p124 = pneg %p47
        %p125 = pneg %p78
        %p126 = pneg %p75
        %s127 = sand.u32 %s65, 1
        %s128 = scalar_lea.sflag [#allocation3], %s127
        %s129 = sand.u32 %s65, 1
        %s130 = smul.addr %s129, 16
        %s131 = scalar_lea.vmem [#allocation2], %s130
        %p132 = scmp.lt.s32.totalorder %s20, 3
        %s133 = scalar_select %p132, %s20, 3
        %p134 = scmp.lt.s32.totalorder %s19, 0
        %s135 = scalar_select %p134, %s19, 0
        %s136 = smul.addr %s133, 24
        %s137 = sadd.s32 %s135, %s136
        %s138 = smul.addr %s137, 8
        %s139 = scalar_lea.vmem %s0, %s138
        %s140 = smul.u32 2, %s20
        %v141 = vld [vmem:[%s139] sm:$0xff]
        %v142 = vld [vmem:[%s139 + $0x10] sm:$0xff]
        %v143 = vld [vmem:[%s139 + $0x20] sm:$0xff]
        %v144 = vld [vmem:[%s139 + $0x30] sm:$0xff]
        %v145 = vld [vmem:[%s139 + $0x40] sm:$0xff]
        %v146 = vld [vmem:[%s139 + $0x50] sm:$0xff]
        %v147 = vadd.f32 %v144, %v142
        %v148 = vadd.f32 %v145, %v143
        %v149 = vadd.f32 %v141, %v145
        %v150 = vadd.f32 %v142, %v146
        %s151 = scalar_lea.vmem %s139, 96
        %v152 = vld [vmem:[%s151] sm:$0xff]
        %v153 = vld [vmem:[%s151 + $0x10] sm:$0xff]
        %v154 = vld [vmem:[%s151 + $0x20] sm:$0xff]
        %v155 = vld [vmem:[%s151 + $0x30] sm:$0xff]
        %v156 = vld [vmem:[%s151 + $0x40] sm:$0xff]
        %v157 = vld [vmem:[%s151 + $0x50] sm:$0xff]
        %v158 = vadd.f32 %v147, %v152
        %v159 = vadd.f32 %v148, %v153
        %v160 = vadd.f32 %v155, %v153
        %v161 = vadd.f32 %v156, %v154
        %v162 = vadd.f32 %v158, %v156
        %v163 = vadd.f32 %v159, %v157
        %v164 = vld [vmem:[%s139 + $0x1] sm:$0xff]
        %v165 = vld [vmem:[%s139 + $0x11] sm:$0xff]
        %v166 = vld [vmem:[%s139 + $0x21] sm:$0xff]
        %v167 = vld [vmem:[%s139 + $0x31] sm:$0xff]
        %v168 = vld [vmem:[%s139 + $0x41] sm:$0xff]
        %v169 = vld [vmem:[%s139 + $0x51] sm:$0xff]
        %v170 = vadd.f32 %v162, %v164
        %v171 = vadd.f32 %v163, %v165
        %v172 = vadd.f32 %v160, %v167
        %v173 = vadd.f32 %v161, %v168
        %v174 = vadd.f32 %v172, %v165
        %v175 = vadd.f32 %v173, %v166
        %v176 = vadd.f32 %v170, %v168
        %v177 = vadd.f32 %v171, %v169
        %v178 = vld [vmem:[%s151 + $0x1] sm:$0xff]
        %v179 = vld [vmem:[%s151 + $0x11] sm:$0xff]
        %v180 = vld [vmem:[%s151 + $0x21] sm:$0xff]
        %v181 = vld [vmem:[%s151 + $0x31] sm:$0xff]
        %v182 = vld [vmem:[%s151 + $0x41] sm:$0xff]
        %v183 = vld [vmem:[%s151 + $0x51] sm:$0xff]
        %v184 = vadd.f32 %v149, %v178
        %v185 = vadd.f32 %v150, %v179
        %v186 = vadd.f32 %v176, %v181
        %v187 = vadd.f32 %v177, %v182
        %v188 = vadd.f32 %v186, %v179
        %v189 = vadd.f32 %v187, %v180
        %v190 = vadd.f32 %v184, %v182
        %v191 = vadd.f32 %v185, %v183
        %v192 = vmul.f32 %v190, 0.015625
        %v193 = vmul.f32 %v191, 0.015625
        %v194 = vmul.f32 %v188, 0.046875
        %v195 = vmul.f32 %v189, 0.046875
        %v196 = vadd.f32 %v192, %v194
        %v197 = vadd.f32 %v193, %v195
        %v198 = vmul.f32 %v174, 0.140625
        %v199 = vmul.f32 %v175, 0.140625
        %v200 = vadd.f32 %v196, %v198
        %v201 = vadd.f32 %v197, %v199
        %vm202 = vcmask 64512
        %203 = vst.msk [vmem:[%s131] sm:$0xff] %vm202, %v200
        %204 = vst.msk [vmem:[%s131 + $0x8] sm:$0xff] %vm202, %v201
        %s205 = sand.u32 %s65, 1
        %s206 = scalar_lea.sflag [#allocation3], %s205
        %s207 = sand.u32 %s65, 1
        %s208 = smul.addr %s207, 16
        %s209 = scalar_lea.vmem [#allocation2], %s208
        // Predicated region
        $region25: #{tpu_custom_call.1} parent=23 // pred_check
          %p210 = pneg %p75
        $region26: #{tpu_custom_call.1} parent=23 // pred_check_branch
          %212 = sbr.rel (%p210) target = $region28
        $region27: #{tpu_custom_call.1} parent=23 // pred_region
          %s213 = smul.u32 2, %s20
          %s215 = ssub.s32 256, 256
          %216 = vsyncadd %s206, %s215
          %s217 = sadd.s32 %s19, %s213
          %s218 = smul.addr %s217, 128
          %s219 = scalar_lea.hbm %s1, %s218
          %s220 = sshll.u32 %s209, 4
          %s221 = int_to_ptr.vmem [resolvable:$true] %s220
          %226 = dma.vmem_to_hbm [thread:$0]  %s221, 256, %s219, %s206, 128, 128, 8
        $region28: #{tpu_custom_call.1} parent=23 // pred_fallthru
          _
      $region24: #{tpu_custom_call.1} parent=5 // pred_fallthru
        _
      %p227 = scmp.le.s32.totalorder 2, %s10
      // Predicated region
      $region29: #{tpu_custom_call.1} parent=5 // pred_check
        %p228 = pneg %p227
      $region30: #{tpu_custom_call.1} parent=5 // pred_check_branch
        %230 = sbr.rel (%p228) target = $region32
      $region31: #{tpu_custom_call.1} parent=5 // pred_region
        %s231 = ssub.s32 %s10, 2
        // Predicated region
        $region33: #{tpu_custom_call.1} parent=31 // pred_check
          %p232 = pneg %p81
        $region34: #{tpu_custom_call.1} parent=31 // pred_check_branch
          %234 = sbr.rel (%p232) target = $region36
        $region35: #{tpu_custom_call.1} parent=31 // pred_region
          %s235 = sand.u32 %s66, 1
          %s236 = scalar_lea.sflag [#allocation3], %s235
          %s237 = sand.u32 %s66, 1
          %s238 = smul.addr %s237, 16
          %s239 = scalar_lea.vmem [#allocation2], %s238
          %240 = dma.done %s236, 256
        $region36: #{tpu_custom_call.1} parent=31 // pred_fallthru
          _
      $region32: #{tpu_custom_call.1} parent=5 // pred_fallthru
        _
    $region6: #{tpu_custom_call.1} parent=1 // loop_footer
      %s14 = sadd.s32 1, %s10
    $region7: #{tpu_custom_call.1} parent=1 // loop_footer_branch
      %9 = sbr.rel target = $region3
    $region8: #{tpu_custom_call.1} parent=1 // loop_exit
      _
    %241 = vsyncpa [#allocation3], 1
    %s242 = scalar_lea.sflag [#allocation3], 1
    %243 = vsyncpa %s242, 1

</llo_original>
